<compile_context>
chip_gen: v5e
topology: v5e:2x2
jax: 0.10.0
libtpu: 0.0.40
codegen_flags: <defaults>
</compile_context>

<pallas_src>
import functools
import math

import jax
import jax.numpy as jnp
from jax.experimental import pallas as pl
from jax.experimental.pallas import tpu as pltpu

_LANES = 128
_CHUNK_ROWS = 128                  # in-kernel sub-tile (bounds live vregs per stage)
_BLOCK_BYTES = 4 * 1024 * 1024     # HBM->VMEM block per grid step


def _round_up(a, b):
    return -(-a // b) * b


def _num_tensorcores():
    """Best-effort TensorCores-per-JAX-device (2 on megacore v4/v5p and v7x)."""
    try:
        info = pltpu.get_tpu_info()
        for name in ("num_cores", "core_count", "num_tensorcores",
                     "tensorcores_per_chip", "cores_per_chip",
                     "num_cores_per_chip"):
            v = getattr(info, name, None)
            if isinstance(v, int) and 1 <= v <= 8:
                return 2 if v >= 2 else 1
    except Exception:
        pass
    try:
        kind = jax.devices()[0].device_kind.lower()
        if any(tag in kind for tag in ("v4", "v5p", "v7", "7x")):
            return 2
    except Exception:
        pass
    return 1   # conservative: single-axis path (correct everywhere)


def _gan_loss_kernel(x_ref, o_ref, *, target_val, chunk_rows, n_chunks):
    """Per-core partial sum of stable BCE-with-logits vs a constant target.

    Grid = (core, tile).  The (8, 128) f32 output block is resident across the
    "arbitrary" tile axis and acts as the accumulator (init at tile 0).
    """
    i = pl.program_id(1)

    @pl.when(i == 0)
    def _init():
        o_ref[...] = jnp.zeros_like(o_ref)

    t = float(target_val)

    def _per_element(x):
        # loss(x) = max(x, 0) - x * t + log1p(exp(-|x|)), specialized on t.
        if t == 1.0:
            base = jnp.maximum(-x, 0.0)
        elif t == 0.0:
            base = jnp.maximum(x, 0.0)
        else:
            base = jnp.maximum(x, 0.0) - x * jnp.float32(t)
        return base + jnp.log1p(jnp.exp(-jnp.abs(x)))

    def _body(c, acc):
        start = pl.multiple_of(c * chunk_rows, chunk_rows)
        x = x_ref[pl.ds(start, chunk_rows), :].astype(jnp.float32)
        per = _per_element(x)
        # Fold (chunk_rows, 128) -> (8, 128): VPU adds across vregs, no XLU.
        return acc + per.reshape(chunk_rows // 8, 8, _LANES).sum(axis=0)

    acc = jax.lax.fori_loop(0, n_chunks, _body,
                            jnp.zeros((8, _LANES), jnp.float32))
    o_ref[...] += acc


def gan_loss(
    x,
    target_is_real,
    is_disc=False,
    *,
    real_label_val=1.0,
    fake_label_val=0.0,
    loss_weight=1.0,
    block_bytes=_BLOCK_BYTES,
):
    """Pallas implementation of GANLoss.forward (BCEWithLogitsLoss, mean)."""
    target_val = float(real_label_val if target_is_real else fake_label_val)
    weight = 1.0 if is_disc else float(loss_weight)

    n = int(x.size)
    dtype = jnp.dtype(x.dtype)
    itemsize = dtype.itemsize
    pack = max(8, 32 // itemsize)            # sublane pack: f32=8, bf16=16, int8=32

    rows_valid = max(1, pl.cdiv(n, _LANES))

    # Tile rows from a byte budget (amortizes per-step overhead), rounded so
    # every tile is a whole number of in-kernel chunks / sublane packs.
    budget_rows = max(pack,
                      (int(block_bytes) // (_LANES * itemsize))
                      // _CHUNK_ROWS * _CHUNK_ROWS)
    if rows_valid >= _CHUNK_ROWS:
        tr = min(budget_rows, _round_up(rows_valid, _CHUNK_ROWS))
        chunk = _CHUNK_ROWS
    else:
        tr = _round_up(rows_valid, pack)
        chunk = tr
    n_chunks = tr // chunk
    tiles_total = pl.cdiv(rows_valid, tr)

    nc = _num_tensorcores()
    nc = nc if (nc > 1 and tiles_total >= nc) else 1
    tiles_per_core = pl.cdiv(tiles_total, nc)
    padded_rows = nc * tiles_per_core * tr

    # Pad value whose per-element loss is exactly 0 in f32 for 0/1 labels
    # (exp(-128) underflows to 0).  For other labels pad with 0 (loss = ln 2)
    # and subtract the known constant contribution afterwards.
    if target_val == 1.0:
        pad_val, pad_loss = 128.0, 0.0
    elif target_val == 0.0:
        pad_val, pad_loss = -128.0, 0.0
    else:
        pad_val, pad_loss = 0.0, math.log(2.0)

    x_flat = jnp.ravel(x)                    # keep native dtype (bf16 stays bf16)
    num_pad = padded_rows * _LANES - n
    if num_pad:
        x_flat = jnp.concatenate(
            [x_flat, jnp.full((num_pad,), pad_val, dtype=dtype)])
    x2d = x_flat.reshape(padded_rows, _LANES)

    kernel = functools.partial(
        _gan_loss_kernel,
        target_val=target_val,
        chunk_rows=chunk,
        n_chunks=n_chunks,
    )

    partial_sums = pl.pallas_call(
        kernel,
        out_shape=jax.ShapeDtypeStruct((nc * 8, _LANES), jnp.float32),
        grid_spec=pltpu.PrefetchScalarGridSpec(
            num_scalar_prefetch=0,
            grid=(nc, tiles_per_core),
            in_specs=[pl.BlockSpec(
                (tr, _LANES),
                lambda c, i: (c * tiles_per_core + i, 0))],
            out_specs=pl.BlockSpec((8, _LANES), lambda c, i: (c, 0)),
        ),
        compiler_params=pltpu.CompilerParams(
            dimension_semantics=("parallel", "arbitrary"),
        ),
    )(x2d)

    total = jnp.sum(partial_sums)
    if pad_loss != 0.0 and num_pad:
        total = total - jnp.float32(num_pad * pad_loss)
    return total * jnp.float32(weight / n)


def _reference_gan_loss(x, target_is_real, is_disc=False,
                        real_label_val=1.0, fake_label_val=0.0,
                        loss_weight=1.0):
    t = real_label_val if target_is_real else fake_label_val
    xf = x.astype(jnp.float32)
    per = jnp.maximum(xf, 0.0) - xf * t + jnp.log1p(jnp.exp(-jnp.abs(xf)))
    loss = jnp.mean(per)
    return loss if is_disc else loss * loss_weight


if __name__ == "__main__":
    key = jax.random.PRNGKey(0)
    k1, k2, k3 = jax.random.split(key, 3)

    ok = True

    # Discriminator-output-like logits, NCHW [B, C, H, W].
    x = jax.random.normal(k1, (2, 4, 16, 16), dtype=jnp.float32) * 3.0
    for target_is_real in (True, False):
        for is_disc in (True, False):
            out = jax.block_until_ready(
                gan_loss(x, target_is_real, is_disc,
                         real_label_val=1.0, fake_label_val=0.0,
                         loss_weight=0.5))
            ref = _reference_gan_loss(x, target_is_real, is_disc,
                                      real_label_val=1.0, fake_label_val=0.0,
                                      loss_weight=0.5)
            ok &= bool(jnp.allclose(out, ref, rtol=1e-5, atol=1e-5))

    # Ragged size (exercises zero-loss padding; no masking anywhere).
    x_r = jax.random.normal(k2, (3, 1, 7, 11), dtype=jnp.float32) * 2.0
    out = jax.block_until_ready(gan_loss(x_r, True, False, loss_weight=0.5))
    ref = _reference_gan_loss(x_r, True, False, loss_weight=0.5)
    ok &= bool(jnp.allclose(out, ref, rtol=1e-5, atol=1e-5))

    # bf16 logits stay bf16 in HBM and are widened inside the kernel.
    x_b = (jax.random.normal(k1, (2, 4, 16, 16)) * 3.0).astype(jnp.bfloat16)
    out = jax.block_until_ready(gan_loss(x_b, False, True))
    ref = _reference_gan_loss(x_b, False, True)
    ok &= bool(jnp.allclose(out, ref, rtol=1e-4, atol=1e-4))

    # Multi-tile path: small block_bytes forces 4 tiles x 4 chunks (and the
    # 2-core parallel split on dual-TensorCore chips).
    x_l = jax.random.normal(k3, (4, 4, 128, 128), dtype=jnp.float32)
    out = jax.block_until_ready(
        gan_loss(x_l, True, False, loss_weight=2.0, block_bytes=256 * 1024))
    ref = _reference_gan_loss(x_l, True, False, loss_weight=2.0)
    ok &= bool(jnp.allclose(out, ref, rtol=1e-4, atol=1e-5))

    print("KERNEL_OK" if ok else "KERNEL_MISMATCH")
</pallas_src>

<mosaic_0001>
module attributes {stable_mosaic.version = 11 : i64} {
  func.func @_gan_loss_kernel(%arg0: i32, %arg1: i32, %arg2: memref<16x128xf32, #tpu.memory_space<vmem>>, %arg3: memref<8x128xf32, #tpu.memory_space<vmem>>) attributes {dimension_semantics = [#tpu.dimension_semantics<parallel>, #tpu.dimension_semantics<arbitrary>], iteration_bounds = array<i64: 1, 1>, scalar_prefetch = 0 : i64, scratch_operands = 0 : i64, tpu.core_type = #tpu.core_type<tc>, window_params = [{transform_indices = @transform_0, window_bounds = array<i64: 16, 128>}, {transform_indices = @transform_1, window_bounds = array<i64: 8, 128>}]} {
    %c0_i32 = arith.constant 0 : i32
    %0 = arith.cmpi eq, %arg1, %c0_i32 : i32
    %1 = arith.extui %0 : i1 to i32
    %c0_i32_0 = arith.constant 0 : i32
    %2 = arith.cmpi ne, %1, %c0_i32_0 : i32
    scf.if %2 {
      %cst_10 = arith.constant 0.000000e+00 : f32
      %24 = vector.broadcast %cst_10 : f32 to vector<8x128xf32>
      %c0_11 = arith.constant 0 : index
      %c0_12 = arith.constant 0 : index
      %25 = vector.load %arg3[%c0_11, %c0_12] : memref<8x128xf32, #tpu.memory_space<vmem>>, vector<8x128xf32>
      tpu.vector_store %arg3[%c0_11, %c0_12], %24 {strides = array<i32>} : memref<8x128xf32, #tpu.memory_space<vmem>>, vector<8x128xf32>,
    } else {
    }
    %cst = arith.constant 0.000000e+00 : f32
    %3 = vector.broadcast %cst : f32 to vector<8x128xf32>
    %c0_i32_1 = arith.constant 0 : i32
    %c16_i32 = arith.constant 16 : i32
    %4 = arith.muli %c0_i32_1, %c16_i32 : i32
    %5 = tpu.assume_multiple %4, 16 : i32
    %6 = arith.index_cast %5 : i32 to index
    %c0 = arith.constant 0 : index
    %7 = vector.load %arg2[%6, %c0] : memref<16x128xf32, #tpu.memory_space<vmem>>, vector<16x128xf32>
    %cst_2 = arith.constant 0.000000e+00 : f32
    %8 = vector.broadcast %cst_2 : f32 to vector<16x128xf32>
    %9 = arith.subf %8, %7 : vector<16x128xf32>
    %cst_3 = arith.constant 0.000000e+00 : f32
    %10 = vector.broadcast %cst_3 : f32 to vector<16x128xf32>
    %11 = arith.maximumf %9, %10 : vector<16x128xf32>
    %12 = math.absf %7 : vector<16x128xf32>
    %cst_4 = arith.constant 0.000000e+00 : f32
    %13 = vector.broadcast %cst_4 : f32 to vector<16x128xf32>
    %14 = arith.subf %13, %12 : vector<16x128xf32>
    %15 = math.exp %14 : vector<16x128xf32>
    %16 = math.log1p %15 : vector<16x128xf32>
    %17 = arith.addf %11, %16 : vector<16x128xf32>
    %18 = vector.shape_cast %17 : vector<16x128xf32> to vector<2x8x128xf32>
    %cst_5 = arith.constant dense<0.000000e+00> : vector<8x128xf32>
    %19 = vector.multi_reduction <add>, %18, %cst_5 [0] : vector<2x8x128xf32> to vector<8x128xf32>
    %20 = arith.addf %3, %19 : vector<8x128xf32>
    %c1_i32 = arith.constant 1 : i32
    %c0_6 = arith.constant 0 : index
    %c0_7 = arith.constant 0 : index
    %21 = vector.load %arg3[%c0_6, %c0_7] : memref<8x128xf32, #tpu.memory_space<vmem>>, vector<8x128xf32>
    %22 = arith.addf %21, %20 : vector<8x128xf32>
    %c0_8 = arith.constant 0 : index
    %c0_9 = arith.constant 0 : index
    %23 = vector.load %arg3[%c0_8, %c0_9] : memref<8x128xf32, #tpu.memory_space<vmem>>, vector<8x128xf32>
    tpu.vector_store %arg3[%c0_8, %c0_9], %22 {strides = array<i32>} : memref<8x128xf32, #tpu.memory_space<vmem>>, vector<8x128xf32>,
    return
  }
  func.func @transform_0(%arg0: i32, %arg1: i32) -> (i32, i32) {
    %c1_i32 = arith.constant 1 : i32
    %0 = arith.muli %arg0, %c1_i32 : i32
    %1 = arith.addi %0, %arg1 : i32
    %c0_i32 = arith.constant 0 : i32
    %c0_i32_0 = arith.constant 0 : i32
    return %1, %c0_i32 : i32, i32
  }
  func.func @transform_1(%arg0: i32, %arg1: i32) -> (i32, i32) {
    %c0_i32 = arith.constant 0 : i32
    %c0_i32_0 = arith.constant 0 : i32
    return %arg0, %c0_i32 : i32, i32
  }
}

</mosaic_0001>

<llo_original>
// kernel: tpu_custom_call.1
$region0: #{tpu_custom_call.1}
  #allocation0 [shape = 'u32[]', space=smem, size = 0x4, offset = 0x4, fixed_abs, tag = 'smem constant byte address 0x4 - core index']
  #allocation1 [shape = 'u32[72,128]{1,0:T(1,128)}', space=vmem, size = 0x9000, scoped, tag = 'internal scratch']
  %s0 = inlined_call_operand.hbm [shape: f32[16,128], index: 0, kind: input, shape index: {}]
  %s1 = inlined_call_operand.hbm [shape: f32[8,128], index: 1, kind: output, shape index: {}]
  %s2 = sld [smem:[#allocation0]]
  $region22: #{tpu_custom_call.1} parent=0
    _
  %s4 = ssub.s32 1, %s2
  %s5 = scalar_select 0, %s4, %s2
  $region1: #{tpu_custom_call.1} parent=0
    #allocation2 [shape = 'u8[8192]{0}', space=vmem, size = 0x2000, scoped, tag = 'input window, operand 0, single buffered']
    #allocation3 [shape = 's32[1]{0}', space=sflag, size = 0x4, scoped, tag = 'scoped memory for tpu_custom_call.1']
    #allocation4 [shape = 's32[1]{0}', space=sflag, size = 0x4, scoped, tag = 'scoped memory for tpu_custom_call.1']
    #allocation5 [shape = 'u8[4096]{0}', space=vmem, size = 0x1000, scoped, tag = 'output window, operand 0, single buffered']
    %6 = vsyncpa [#allocation3], 0
    %7 = vsyncpa [#allocation4], 0
    // Predicated region
    $region2: #{tpu_custom_call.1} parent=1 // pred_check
      _
    $region3: #{tpu_custom_call.1} parent=1 // pred_check_branch
      %9 = sbr.rel (0) target = $region5
    $region4: #{tpu_custom_call.1} parent=1 // pred_region
      %s10 = sadd.s32 0, 0
      %s11 = smul.u32 2, %s10
      %13 = vsyncadd [#allocation3], 0
      %s14 = smul.addr %s11, 8
      %s15 = scalar_lea.hbm %s0, %s14
      %s16 = sshll.u32 %s15, 4
      %s17 = int_to_ptr.hbm [resolvable:$true] %s16
      %s18 = sshll.u32 [#allocation2], 4
      %s19 = int_to_ptr.vmem [resolvable:$true] %s18
      %24 = dma.hbm_to_vmem [thread:$0]  %s17, 256, %s19, [#allocation3], 128, 128, 8
    $region5: #{tpu_custom_call.1} parent=1 // pred_fallthru
      _
    // Predicated region
    $region6: #{tpu_custom_call.1} parent=1 // pred_check
      _
    $region7: #{tpu_custom_call.1} parent=1 // pred_check_branch
      %26 = sbr.rel (0) target = $region9
    $region8: #{tpu_custom_call.1} parent=1 // pred_region
      %28 = dma.done [#allocation3], 256
    $region9: #{tpu_custom_call.1} parent=1 // pred_fallthru
      _
    %s29 = sadd.s32 0, 0
    %s30 = smul.u32 2, %s29
    %p31 = scmp.eq.s32.totalorder 0, 0
    // Predicated region
    $region10: #{tpu_custom_call.1} parent=1 // pred_check
      %p32 = pneg %p31
    $region11: #{tpu_custom_call.1} parent=1 // pred_check_branch
      %34 = sbr.rel (%p32) target = $region13
    $region12: #{tpu_custom_call.1} parent=1 // pred_region
      %35 = vst [vmem:[#allocation5] sm:$0xff] 0.0
    $region13: #{tpu_custom_call.1} parent=1 // pred_fallthru
      _
    %v36 = vld [vmem:[#allocation2] sm:$0xff]
    %v37 = vld [vmem:[#allocation2 + $0x8] sm:$0xff]
    %v38 = vsub.f32 0.0, %v36
    %v39 = vsub.f32 0.0, %v37
    %v40 = vmax.f32 %v38, 0.0
    %v41 = vmax.f32 %v39, 0.0
    %v42 = vand.u32 2147483647, %v36
    %v43 = vand.u32 2147483647, %v37
    %v44 = vsub.f32 0.0, %v42
    %v45 = vsub.f32 0.0, %v43
    %v46 = vmul.f32 %v44, 1.442695
    %v47 = vpow.pop %v46
    %v48 = vmul.f32 %v45, 1.442695
    %v49 = vpow.pop %v48
    %v50 = vadd.f32 %v47, 1.0
    %v51 = vlog2.pop %v50
    %v52 = vmul.f32 %v51, 0.6931472
    %v53 = vmul.f32 -0.5, %v47
    %v54 = vadd.f32 %v53, 1.0
    %v55 = vmul.f32 %v54, %v47
    %v56 = vand.u32 2147483647, %v47
    %vm57 = vcmp.lt.f32.partialorder %v56, 0.0004427343
    %v58 = vsel %vm57, %v55, %v52
    %v59 = vadd.f32 %v49, 1.0
    %v60 = vlog2.pop %v59
    %v61 = vmul.f32 %v60, 0.6931472
    %v62 = vmul.f32 -0.5, %v49
    %v63 = vadd.f32 %v62, 1.0
    %v64 = vmul.f32 %v63, %v49
    %v65 = vand.u32 2147483647, %v49
    %vm66 = vcmp.lt.f32.partialorder %v65, 0.0004427343
    %v67 = vsel %vm66, %v64, %v61
    %v68 = vadd.f32 %v40, %v58
    %v69 = vadd.f32 %v41, %v67
    %v70 = vadd.f32 %v68, %v69
    %v71 = vadd.f32 %v70, 0.0
    %v72 = vld [vmem:[#allocation5] sm:$0xff]
    %v73 = vadd.f32 %v72, %v71
    %74 = vst [vmem:[#allocation5] sm:$0xff] %v73
    // Predicated region
    $region14: #{tpu_custom_call.1} parent=1 // pred_check
      _
    $region15: #{tpu_custom_call.1} parent=1 // pred_check_branch
      %76 = sbr.rel (0) target = $region17
    $region16: #{tpu_custom_call.1} parent=1 // pred_region
      %78 = vsyncadd [#allocation4], 0
      %s80 = sshll.u32 [#allocation5], 4
      %s81 = int_to_ptr.vmem [resolvable:$true] %s80
      %s82 = sshll.u32 %s1, 4
      %s83 = int_to_ptr.hbm [resolvable:$true] %s82
      %85 = dma.vmem_to_hbm [thread:$0]  %s81, 128, %s83, [#allocation4]
    $region17: #{tpu_custom_call.1} parent=1 // pred_fallthru
      _
    // Predicated region
    $region18: #{tpu_custom_call.1} parent=1 // pred_check
      _
    $region19: #{tpu_custom_call.1} parent=1 // pred_check_branch
      %87 = sbr.rel (0) target = $region21
    $region20: #{tpu_custom_call.1} parent=1 // pred_region
      %89 = dma.done [#allocation4], 128
    $region21: #{tpu_custom_call.1} parent=1 // pred_fallthru
      _
    %90 = vsyncpa [#allocation3], 1
    %91 = vsyncpa [#allocation4], 1

</llo_original>
